<compile_context>
chip_gen: v5e
topology: v5e:2x2
jax: 0.10.0
libtpu: 0.0.40
codegen_flags: <defaults>
</compile_context>

<pallas_src>
import math
import numpy as np
import jax
import jax.numpy as jnp
from jax import lax
from jax.experimental import pallas as pl
from jax.experimental.pallas import tpu as pltpu

# ----- static configuration (small shapes consistent with the module) -----
B, C, H, W = 2, 4, 16, 16          # input images, NCHW
N = H * W                          # anchors (one per pixel) -> lane axis (256)
NUM_CLASSES = 8
NUM_ROT = 3                        # num_rotation_parameters
NUM_TRANS = 3                      # num_translation_parameters
D = NUM_CLASSES + 4 + NUM_TRANS + NUM_ROT   # fused head output width (18)
MAX_DET = 100                      # max_detections
MP = 128                           # lane-padded detection slots (>= MAX_DET)
IMG = 128.0                        # synthetic image size for box clipping
SCORE_T = 0.01                     # score_threshold
NMS_T = 0.01                       # nms_threshold
LOGIT_T = float(math.log(SCORE_T / (1.0 - SCORE_T)))  # threshold in logit space
NUM_FIELDS = 4 + 1 + 1 + NUM_ROT + NUM_TRANS           # x1,y1,x2,y2,score,label,rot,trans = 12


# --------------------------------------------------------------------------
# Fused kernel: per-anchor linear heads + anchor decode + sigmoid-argmax +
# score threshold + greedy NMS + top-k, one image per grid step.
# --------------------------------------------------------------------------
def _fused_kernel(x_ref, w_ref, b_ref, anc_ref,
                  box_ref, score_ref, label_ref, rot_ref, trans_ref):
    # ---- per-pixel linear heads: (D,C) @ (C,N) via 4 broadcast-FMAs (C=4) ----
    x = x_ref[0]                         # (C, N)
    w = w_ref[...]                       # (D, C)
    heads = b_ref[...] + w[:, 0:1] * x[0:1, :]
    for c in range(1, C):                # static unroll, C=4
        heads = heads + w[:, c:c + 1] * x[c:c + 1, :]          # (D, N) f32

    logits = heads[0:NUM_CLASSES, :]                           # (K, N)
    reg = heads[NUM_CLASSES:NUM_CLASSES + 4, :]                # (4, N)
    trans = heads[NUM_CLASSES + 4:NUM_CLASSES + 4 + NUM_TRANS, :]   # (3, N)
    rot = heads[NUM_CLASSES + 4 + NUM_TRANS:D, :]              # (3, N)

    # ---- anchor box decode (RegressBoxes + ClipBoxes), lane-major rows ----
    anc = anc_ref[...]                                         # (4, N)
    ax1, ay1, ax2, ay2 = anc[0:1, :], anc[1:2, :], anc[2:3, :], anc[3:4, :]
    aw = ax2 - ax1
    ah = ay2 - ay1
    acx = ax1 + 0.5 * aw
    acy = ay1 + 0.5 * ah
    dx, dy, dw, dh = reg[0:1, :], reg[1:2, :], reg[2:3, :], reg[3:4, :]
    cx = acx + dx * aw * 0.1
    cy = acy + dy * ah * 0.1
    bw = aw * jnp.exp(dw * 0.2)
    bh = ah * jnp.exp(dh * 0.2)
    x1 = jnp.clip(cx - 0.5 * bw, 0.0, IMG - 1.0)
    y1 = jnp.clip(cy - 0.5 * bh, 0.0, IMG - 1.0)
    x2 = jnp.clip(cx + 0.5 * bw, 0.0, IMG - 1.0)
    y2 = jnp.clip(cy + 0.5 * bh, 0.0, IMG - 1.0)
    areas = (x2 - x1) * (y2 - y1)                              # (1, N)

    # ---- class max / argmax in logit space (sigmoid is monotonic) ----
    best_logit = jnp.max(logits, axis=0, keepdims=True)        # (1, N)
    cls_iota = lax.broadcasted_iota(jnp.int32, (NUM_CLASSES, N), 0)
    labels = jnp.min(jnp.where(logits == best_logit, cls_iota, NUM_CLASSES),
                     axis=0, keepdims=True)                    # (1, N) int32

    lane_iota = lax.broadcasted_iota(jnp.int32, (1, N), 1)     # anchor index
    slot_iota = lax.broadcasted_iota(jnp.int32, (1, MP), 1)    # detection slot

    # Stacked field tile: one masked lane-reduce extracts every attribute of
    # the selected anchor at once.
    fields = jnp.concatenate(
        [x1, y1, x2, y2, best_logit, labels.astype(jnp.float32), rot, trans],
        axis=0)                                                # (12, N)

    # score threshold (strict >), suppressed lanes carry -inf
    masked0 = jnp.where(best_logit > LOGIT_T, best_logit, -jnp.inf)   # (1, N)
    best0 = jnp.max(masked0, axis=1, keepdims=True)                   # (1, 1)
    sel0 = jnp.zeros((NUM_FIELDS, MP), jnp.float32)

    def cond(carry):
        k, _, _, best = carry
        return jnp.logical_and(k < MAX_DET, best[0, 0] > LOGIT_T)

    def body(carry):
        k, masked, sel, best = carry                           # best == max(masked)
        best_i = jnp.min(jnp.where(masked == best, lane_iota, N),
                         axis=1, keepdims=True)                # (1, 1) lowest-idx tie
        onehot = lane_iota == best_i                           # (1, N)
        picked = jnp.sum(jnp.where(onehot, fields, 0.0),
                         axis=1, keepdims=True)                # (12, 1)

        bx1, by1 = picked[0:1, :], picked[1:2, :]
        bx2, by2 = picked[2:3, :], picked[3:4, :]
        barea = (bx2 - bx1) * (by2 - by1)
        iw = jnp.maximum(jnp.minimum(bx2, x2) - jnp.maximum(bx1, x1), 0.0)
        ih = jnp.maximum(jnp.minimum(by2, y2) - jnp.maximum(by1, y1), 0.0)
        inter = iw * ih
        iou = inter / jnp.maximum(barea + areas - inter, 1e-8)  # (1, N)

        keep = jnp.logical_and(iou <= NMS_T, jnp.logical_not(onehot))
        masked = jnp.where(keep, masked, -jnp.inf)
        new_best = jnp.max(masked, axis=1, keepdims=True)       # for next cond

        sel = jnp.where(slot_iota == k, picked, sel)            # write slot k
        return (k + 1, masked, sel, new_best)

    count, _, sel, _ = lax.while_loop(
        cond, body, (jnp.int32(0), masked0, sel0, best0))

    valid = slot_iota < count                                   # (1, MP)
    neg1 = jnp.float32(-1.0)
    box_ref[0] = jnp.where(valid, sel[0:4, :], neg1)            # (4, MP)
    score_ref[0] = jnp.where(valid, jax.nn.sigmoid(sel[4:5, :]), neg1)
    lab = sel[5:6, :].astype(jnp.int32)
    label_ref[0] = jnp.where(valid, lab, jnp.full_like(lab, -1))
    rot_ref[0] = jnp.where(valid, sel[6:6 + NUM_ROT, :], neg1)
    trans_ref[0] = jnp.where(valid, sel[6 + NUM_ROT:NUM_FIELDS, :], neg1)


def _run_fused(xf, w, bias, anchors):
    return pl.pallas_call(
        _fused_kernel,
        out_shape=(jax.ShapeDtypeStruct((B, 4, MP), jnp.float32),
                   jax.ShapeDtypeStruct((B, 1, MP), jnp.float32),
                   jax.ShapeDtypeStruct((B, 1, MP), jnp.int32),
                   jax.ShapeDtypeStruct((B, NUM_ROT, MP), jnp.float32),
                   jax.ShapeDtypeStruct((B, NUM_TRANS, MP), jnp.float32)),
        grid=(B,),
        in_specs=[pl.BlockSpec((1, C, N), lambda b: (b, 0, 0)),
                  pl.BlockSpec((D, C), lambda b: (0, 0)),
                  pl.BlockSpec((D, 1), lambda b: (0, 0)),
                  pl.BlockSpec((4, N), lambda b: (0, 0))],
        out_specs=(pl.BlockSpec((1, 4, MP), lambda b: (b, 0, 0)),
                   pl.BlockSpec((1, 1, MP), lambda b: (b, 0, 0)),
                   pl.BlockSpec((1, 1, MP), lambda b: (b, 0, 0)),
                   pl.BlockSpec((1, NUM_ROT, MP), lambda b: (b, 0, 0)),
                   pl.BlockSpec((1, NUM_TRANS, MP), lambda b: (b, 0, 0))),
        compiler_params=pltpu.CompilerParams(
            dimension_semantics=("parallel",)),
    )(xf, w, bias, anchors)


# --------------------------------------------------------------------------
# Full forward (ModelWithFilterDet.forward equivalent).
# --------------------------------------------------------------------------
def forward(x, params):
    w, bias, anchors = params
    # NCHW -> (B, C, H*W): per-pixel anchors land on the 128-lane axis.
    xf = x.reshape(B, C, N)
    box, score, label, rot, trans = _run_fused(xf, w, bias, anchors)
    boxes_out = jnp.transpose(box[:, :, :MAX_DET], (0, 2, 1))     # (B, 100, 4)
    scores_out = score[:, 0, :MAX_DET]                            # (B, 100)
    labels_out = label[:, 0, :MAX_DET]                            # (B, 100) int32
    rot_out = jnp.transpose(rot[:, :, :MAX_DET], (0, 2, 1))       # (B, 100, 3)
    trans_out = jnp.transpose(trans[:, :, :MAX_DET], (0, 2, 1))   # (B, 100, 3)
    return boxes_out, scores_out, labels_out, rot_out, trans_out


if __name__ == "__main__":
    key = jax.random.PRNGKey(0)
    kx, kw, kb = jax.random.split(key, 3)

    # deterministic synthetic input + head parameters
    x = jax.random.normal(kx, (B, C, H, W), dtype=jnp.float32)
    w = jax.random.normal(kw, (D, C), dtype=jnp.float32) * 0.5     # (D, C)
    bias = jax.random.normal(kb, (D, 1), dtype=jnp.float32) * 0.1  # (D, 1)

    # deterministic anchor grid (one square anchor per pixel), (4, N) lane-major
    ys, xs = jnp.meshgrid(jnp.arange(H, dtype=jnp.float32),
                          jnp.arange(W, dtype=jnp.float32), indexing="ij")
    stride = IMG / H
    acx = (xs + 0.5) * stride
    acy = (ys + 0.5) * stride
    half = stride
    anchors = jnp.stack([acx - half, acy - half, acx + half, acy + half],
                        axis=-1).reshape(N, 4).T                   # (4, N)

    fwd = jax.jit(forward)
    boxes, scores, labels, rot, trans = fwd(x, (w, bias, anchors))
    jax.block_until_ready((boxes, scores, labels, rot, trans))

    # mimic the torch module's `.cpu().numpy()` return tuple
    boxes_np = np.asarray(boxes)
    scores_np = np.asarray(scores)
    labels_np = np.asarray(labels)
    rot_np = np.asarray(rot)
    trans_np = np.asarray(trans)

    assert boxes_np.shape == (B, MAX_DET, 4)
    assert scores_np.shape == (B, MAX_DET)
    assert labels_np.shape == (B, MAX_DET) and labels_np.dtype == np.int32
    assert rot_np.shape == (B, MAX_DET, NUM_ROT)
    assert trans_np.shape == (B, MAX_DET, NUM_TRANS)

    print("KERNEL_OK")
</pallas_src>

<mosaic_0001>
module attributes {stable_mosaic.version = 11 : i64} {
  func.func @_fused_kernel(%arg0: i32, %arg1: memref<1x4x256xf32, #tpu.memory_space<vmem>>, %arg2: memref<18x4xf32, #tpu.memory_space<vmem>>, %arg3: memref<18x1xf32, #tpu.memory_space<vmem>>, %arg4: memref<4x256xf32, #tpu.memory_space<vmem>>, %arg5: memref<1x4x128xf32, #tpu.memory_space<vmem>>, %arg6: memref<1x1x128xf32, #tpu.memory_space<vmem>>, %arg7: memref<1x1x128xi32, #tpu.memory_space<vmem>>, %arg8: memref<1x3x128xf32, #tpu.memory_space<vmem>>, %arg9: memref<1x3x128xf32, #tpu.memory_space<vmem>>) attributes {dimension_semantics = [#tpu.dimension_semantics<parallel>], iteration_bounds = array<i64: 2>, scalar_prefetch = 0 : i64, scratch_operands = 0 : i64, tpu.core_type = #tpu.core_type<tc>, window_params = [{transform_indices = @transform_0, window_bounds = array<i64: 1, 4, 256>}, {pipeline_mode = #tpu.pipeline_mode<synchronous>, transform_indices = @transform_1, window_bounds = array<i64: 18, 4>}, {pipeline_mode = #tpu.pipeline_mode<synchronous>, transform_indices = @transform_2, window_bounds = array<i64: 18, 1>}, {pipeline_mode = #tpu.pipeline_mode<synchronous>, transform_indices = @transform_3, window_bounds = array<i64: 4, 256>}, {transform_indices = @transform_4, window_bounds = array<i64: 1, 4, 128>}, {transform_indices = @transform_5, window_bounds = array<i64: 1, 1, 128>}, {transform_indices = @transform_6, window_bounds = array<i64: 1, 1, 128>}, {transform_indices = @transform_7, window_bounds = array<i64: 1, 3, 128>}, {transform_indices = @transform_8, window_bounds = array<i64: 1, 3, 128>}]} {
    %c0 = arith.constant 0 : index
    %c0_0 = arith.constant 0 : index
    %c0_1 = arith.constant 0 : index
    %0 = vector.load %arg1[%c0, %c0_0, %c0_1] : memref<1x4x256xf32, #tpu.memory_space<vmem>>, vector<1x4x256xf32>
    %1 = vector.shape_cast %0 : vector<1x4x256xf32> to vector<4x256xf32>
    %c0_2 = arith.constant 0 : index
    %c0_3 = arith.constant 0 : index
    %2 = vector.load %arg2[%c0_2, %c0_3] : memref<18x4xf32, #tpu.memory_space<vmem>>, vector<18x4xf32>
    %c0_4 = arith.constant 0 : index
    %c0_5 = arith.constant 0 : index
    %3 = vector.load %arg3[%c0_4, %c0_5] : memref<18x1xf32, #tpu.memory_space<vmem>>, vector<18x1xf32>
    %4 = vector.extract_strided_slice %2 {offsets = [0, 0], sizes = [18, 1], strides = [1, 1]} : vector<18x4xf32> to vector<18x1xf32>
    %5 = vector.extract_strided_slice %1 {offsets = [0, 0], sizes = [1, 256], strides = [1, 1]} : vector<4x256xf32> to vector<1x256xf32>
    %6 = vector.broadcast %4 : vector<18x1xf32> to vector<18x256xf32>
    %7 = vector.broadcast %5 : vector<1x256xf32> to vector<18x256xf32>
    %8 = arith.mulf %6, %7 : vector<18x256xf32>
    %9 = vector.broadcast %3 : vector<18x1xf32> to vector<18x256xf32>
    %10 = arith.addf %9, %8 : vector<18x256xf32>
    %11 = vector.extract_strided_slice %2 {offsets = [0, 1], sizes = [18, 1], strides = [1, 1]} : vector<18x4xf32> to vector<18x1xf32>
    %12 = vector.extract_strided_slice %1 {offsets = [1, 0], sizes = [1, 256], strides = [1, 1]} : vector<4x256xf32> to vector<1x256xf32>
    %13 = vector.broadcast %11 : vector<18x1xf32> to vector<18x256xf32>
    %14 = vector.broadcast %12 : vector<1x256xf32> to vector<18x256xf32>
    %15 = arith.mulf %13, %14 : vector<18x256xf32>
    %16 = arith.addf %10, %15 : vector<18x256xf32>
    %17 = vector.extract_strided_slice %2 {offsets = [0, 2], sizes = [18, 1], strides = [1, 1]} : vector<18x4xf32> to vector<18x1xf32>
    %18 = vector.extract_strided_slice %1 {offsets = [2, 0], sizes = [1, 256], strides = [1, 1]} : vector<4x256xf32> to vector<1x256xf32>
    %19 = vector.broadcast %17 : vector<18x1xf32> to vector<18x256xf32>
    %20 = vector.broadcast %18 : vector<1x256xf32> to vector<18x256xf32>
    %21 = arith.mulf %19, %20 : vector<18x256xf32>
    %22 = arith.addf %16, %21 : vector<18x256xf32>
    %23 = vector.extract_strided_slice %2 {offsets = [0, 3], sizes = [18, 1], strides = [1, 1]} : vector<18x4xf32> to vector<18x1xf32>
    %24 = vector.extract_strided_slice %1 {offsets = [3, 0], sizes = [1, 256], strides = [1, 1]} : vector<4x256xf32> to vector<1x256xf32>
    %25 = vector.broadcast %23 : vector<18x1xf32> to vector<18x256xf32>
    %26 = vector.broadcast %24 : vector<1x256xf32> to vector<18x256xf32>
    %27 = arith.mulf %25, %26 : vector<18x256xf32>
    %28 = arith.addf %22, %27 : vector<18x256xf32>
    %29 = vector.extract_strided_slice %28 {offsets = [0, 0], sizes = [8, 256], strides = [1, 1]} : vector<18x256xf32> to vector<8x256xf32>
    %30 = vector.extract_strided_slice %28 {offsets = [8, 0], sizes = [4, 256], strides = [1, 1]} : vector<18x256xf32> to vector<4x256xf32>
    %31 = vector.extract_strided_slice %28 {offsets = [12, 0], sizes = [3, 256], strides = [1, 1]} : vector<18x256xf32> to vector<3x256xf32>
    %32 = vector.extract_strided_slice %28 {offsets = [15, 0], sizes = [3, 256], strides = [1, 1]} : vector<18x256xf32> to vector<3x256xf32>
    %c0_6 = arith.constant 0 : index
    %c0_7 = arith.constant 0 : index
    %33 = vector.load %arg4[%c0_6, %c0_7] : memref<4x256xf32, #tpu.memory_space<vmem>>, vector<4x256xf32>
    %34 = vector.extract_strided_slice %33 {offsets = [0, 0], sizes = [1, 256], strides = [1, 1]} : vector<4x256xf32> to vector<1x256xf32>
    %35 = vector.extract_strided_slice %33 {offsets = [1, 0], sizes = [1, 256], strides = [1, 1]} : vector<4x256xf32> to vector<1x256xf32>
    %36 = vector.extract_strided_slice %33 {offsets = [2, 0], sizes = [1, 256], strides = [1, 1]} : vector<4x256xf32> to vector<1x256xf32>
    %37 = vector.extract_strided_slice %33 {offsets = [3, 0], sizes = [1, 256], strides = [1, 1]} : vector<4x256xf32> to vector<1x256xf32>
    %38 = arith.subf %36, %34 : vector<1x256xf32>
    %39 = arith.subf %37, %35 : vector<1x256xf32>
    %cst = arith.constant 5.000000e-01 : f32
    %40 = vector.broadcast %cst : f32 to vector<1x256xf32>
    %41 = arith.mulf %40, %38 : vector<1x256xf32>
    %42 = arith.addf %34, %41 : vector<1x256xf32>
    %cst_8 = arith.constant 5.000000e-01 : f32
    %43 = vector.broadcast %cst_8 : f32 to vector<1x256xf32>
    %44 = arith.mulf %43, %39 : vector<1x256xf32>
    %45 = arith.addf %35, %44 : vector<1x256xf32>
    %46 = vector.extract_strided_slice %30 {offsets = [0, 0], sizes = [1, 256], strides = [1, 1]} : vector<4x256xf32> to vector<1x256xf32>
    %47 = vector.extract_strided_slice %30 {offsets = [1, 0], sizes = [1, 256], strides = [1, 1]} : vector<4x256xf32> to vector<1x256xf32>
    %48 = vector.extract_strided_slice %30 {offsets = [2, 0], sizes = [1, 256], strides = [1, 1]} : vector<4x256xf32> to vector<1x256xf32>
    %49 = vector.extract_strided_slice %30 {offsets = [3, 0], sizes = [1, 256], strides = [1, 1]} : vector<4x256xf32> to vector<1x256xf32>
    %50 = arith.mulf %46, %38 : vector<1x256xf32>
    %cst_9 = arith.constant 1.000000e-01 : f32
    %51 = vector.broadcast %cst_9 : f32 to vector<1x256xf32>
    %52 = arith.mulf %50, %51 : vector<1x256xf32>
    %53 = arith.addf %42, %52 : vector<1x256xf32>
    %54 = arith.mulf %47, %39 : vector<1x256xf32>
    %cst_10 = arith.constant 1.000000e-01 : f32
    %55 = vector.broadcast %cst_10 : f32 to vector<1x256xf32>
    %56 = arith.mulf %54, %55 : vector<1x256xf32>
    %57 = arith.addf %45, %56 : vector<1x256xf32>
    %cst_11 = arith.constant 2.000000e-01 : f32
    %58 = vector.broadcast %cst_11 : f32 to vector<1x256xf32>
    %59 = arith.mulf %48, %58 : vector<1x256xf32>
    %60 = math.exp %59 : vector<1x256xf32>
    %61 = arith.mulf %38, %60 : vector<1x256xf32>
    %cst_12 = arith.constant 2.000000e-01 : f32
    %62 = vector.broadcast %cst_12 : f32 to vector<1x256xf32>
    %63 = arith.mulf %49, %62 : vector<1x256xf32>
    %64 = math.exp %63 : vector<1x256xf32>
    %65 = arith.mulf %39, %64 : vector<1x256xf32>
    %cst_13 = arith.constant 5.000000e-01 : f32
    %66 = vector.broadcast %cst_13 : f32 to vector<1x256xf32>
    %67 = arith.mulf %66, %61 : vector<1x256xf32>
    %68 = arith.subf %53, %67 : vector<1x256xf32>
    %cst_14 = arith.constant 0.000000e+00 : f32
    %cst_15 = arith.constant 1.270000e+02 : f32
    %69 = vector.broadcast %cst_14 : f32 to vector<1x256xf32>
    %70 = arith.maximumf %69, %68 : vector<1x256xf32>
    %71 = vector.broadcast %cst_15 : f32 to vector<1x256xf32>
    %72 = arith.minimumf %71, %70 : vector<1x256xf32>
    %cst_16 = arith.constant 5.000000e-01 : f32
    %73 = vector.broadcast %cst_16 : f32 to vector<1x256xf32>
    %74 = arith.mulf %73, %65 : vector<1x256xf32>
    %75 = arith.subf %57, %74 : vector<1x256xf32>
    %cst_17 = arith.constant 0.000000e+00 : f32
    %cst_18 = arith.constant 1.270000e+02 : f32
    %76 = vector.broadcast %cst_17 : f32 to vector<1x256xf32>
    %77 = arith.maximumf %76, %75 : vector<1x256xf32>
    %78 = vector.broadcast %cst_18 : f32 to vector<1x256xf32>
    %79 = arith.minimumf %78, %77 : vector<1x256xf32>
    %cst_19 = arith.constant 5.000000e-01 : f32
    %80 = vector.broadcast %cst_19 : f32 to vector<1x256xf32>
    %81 = arith.mulf %80, %61 : vector<1x256xf32>
    %82 = arith.addf %53, %81 : vector<1x256xf32>
    %cst_20 = arith.constant 0.000000e+00 : f32
    %cst_21 = arith.constant 1.270000e+02 : f32
    %83 = vector.broadcast %cst_20 : f32 to vector<1x256xf32>
    %84 = arith.maximumf %83, %82 : vector<1x256xf32>
    %85 = vector.broadcast %cst_21 : f32 to vector<1x256xf32>
    %86 = arith.minimumf %85, %84 : vector<1x256xf32>
    %cst_22 = arith.constant 5.000000e-01 : f32
    %87 = vector.broadcast %cst_22 : f32 to vector<1x256xf32>
    %88 = arith.mulf %87, %65 : vector<1x256xf32>
    %89 = arith.addf %57, %88 : vector<1x256xf32>
    %cst_23 = arith.constant 0.000000e+00 : f32
    %cst_24 = arith.constant 1.270000e+02 : f32
    %90 = vector.broadcast %cst_23 : f32 to vector<1x256xf32>
    %91 = arith.maximumf %90, %89 : vector<1x256xf32>
    %92 = vector.broadcast %cst_24 : f32 to vector<1x256xf32>
    %93 = arith.minimumf %92, %91 : vector<1x256xf32>
    %94 = arith.subf %86, %72 : vector<1x256xf32>
    %95 = arith.subf %93, %79 : vector<1x256xf32>
    %96 = arith.mulf %94, %95 : vector<1x256xf32>
    %cst_25 = arith.constant dense<0xFF800000> : vector<256xf32>
    %97 = vector.multi_reduction <maximumf>, %29, %cst_25 [0] : vector<8x256xf32> to vector<256xf32>
    %98 = vector.shape_cast %97 : vector<256xf32> to vector<1x256xf32>
    %99 = tpu.iota {dimensions = array<i32: 0>} : vector<8x256xi32>
    %100 = vector.broadcast %98 : vector<1x256xf32> to vector<8x256xf32>
    %101 = arith.cmpf oeq, %29, %100 : vector<8x256xf32>
    %c8_i32 = arith.constant 8 : i32
    %102 = vector.broadcast %c8_i32 : i32 to vector<8x256xi32>
    %103 = arith.select %101, %99, %102 : vector<8x256xi1>, vector<8x256xi32>
    %cst_26 = arith.constant dense<2147483647> : vector<256xi32>
    %104 = vector.multi_reduction <minsi>, %103, %cst_26 [0] : vector<8x256xi32> to vector<256xi32>
    %105 = vector.shape_cast %104 : vector<256xi32> to vector<1x256xi32>
    %106 = tpu.iota {dimensions = array<i32: 1>} : vector<1x256xi32>
    %107 = tpu.iota {dimensions = array<i32: 1>} : vector<1x128xi32>
    %108 = arith.sitofp %105 : vector<1x256xi32> to vector<1x256xf32>
    %109 = tpu.concatenate %72, %79, %86, %93, %98, %108, %32, %31 in 0 : vector<1x256xf32>, vector<1x256xf32>, vector<1x256xf32>, vector<1x256xf32>, vector<1x256xf32>, vector<1x256xf32>, vector<3x256xf32>, vector<3x256xf32> -> vector<12x256xf32>
    %cst_27 = arith.constant -4.595120e+00 : f32
    %110 = vector.broadcast %cst_27 : f32 to vector<1x256xf32>
    %111 = arith.cmpf ogt, %98, %110 : vector<1x256xf32>
    %cst_28 = arith.constant 0xFF800000 : f32
    %112 = vector.broadcast %cst_28 : f32 to vector<1x256xf32>
    %113 = arith.select %111, %98, %112 : vector<1x256xi1>, vector<1x256xf32>
    %cst_29 = arith.constant dense<0xFF800000> : vector<1xf32>
    %114 = vector.multi_reduction <maximumf>, %113, %cst_29 [1] : vector<1x256xf32> to vector<1xf32>
    %115 = vector.shape_cast %114 : vector<1xf32> to vector<1x1xf32>
    %cst_30 = arith.constant 0.000000e+00 : f32
    %116 = vector.broadcast %cst_30 : f32 to vector<12x128xf32>
    %c0_i32 = arith.constant 0 : i32
    %117:4 = scf.while (%arg10 = %c0_i32, %arg11 = %113, %arg12 = %116, %arg13 = %115) : (i32, vector<1x256xf32>, vector<12x128xf32>, vector<1x1xf32>) -> (i32, vector<1x256xf32>, vector<12x128xf32>, vector<1x1xf32>) {
      %c100_i32 = arith.constant 100 : i32
      %162 = arith.cmpi slt, %arg10, %c100_i32 : i32
      %163 = vector.extract %arg13[0, 0] : f32 from vector<1x1xf32>
      %cst_51 = arith.constant -4.595120e+00 : f32
      %164 = arith.cmpf ogt, %163, %cst_51 : f32
      %165 = arith.andi %162, %164 : i1
      scf.condition(%165) %arg10, %arg11, %arg12, %arg13 : i32, vector<1x256xf32>, vector<12x128xf32>, vector<1x1xf32>
    } do {
    ^bb0(%arg10: i32, %arg11: vector<1x256xf32>, %arg12: vector<12x128xf32>, %arg13: vector<1x1xf32>):
      %162 = vector.broadcast %arg13 : vector<1x1xf32> to vector<1x256xf32>
      %163 = arith.cmpf oeq, %arg11, %162 : vector<1x256xf32>
      %c256_i32 = arith.constant 256 : i32
      %164 = vector.broadcast %c256_i32 : i32 to vector<1x256xi32>
      %165 = arith.select %163, %106, %164 : vector<1x256xi1>, vector<1x256xi32>
      %cst_51 = arith.constant dense<2147483647> : vector<1xi32>
      %166 = vector.multi_reduction <minsi>, %165, %cst_51 [1] : vector<1x256xi32> to vector<1xi32>
      %167 = vector.shape_cast %166 : vector<1xi32> to vector<1x1xi32>
      %168 = vector.broadcast %167 : vector<1x1xi32> to vector<1x256xi32>
      %169 = arith.cmpi eq, %106, %168 : vector<1x256xi32>
      %cst_52 = arith.constant 0.000000e+00 : f32
      %170 = vector.shape_cast %169 : vector<1x256xi1> to vector<1x256xi1>
      %171 = vector.broadcast %170 : vector<1x256xi1> to vector<12x256xi1>
      %172 = vector.broadcast %cst_52 : f32 to vector<12x256xf32>
      %173 = arith.select %171, %109, %172 : vector<12x256xi1>, vector<12x256xf32>
      %cst_53 = arith.constant dense<0.000000e+00> : vector<12xf32>
      %174 = vector.multi_reduction <add>, %173, %cst_53 [1] : vector<12x256xf32> to vector<12xf32>
      %175 = vector.shape_cast %174 : vector<12xf32> to vector<12x1xf32>
      %176 = vector.extract_strided_slice %175 {offsets = [0, 0], sizes = [1, 1], strides = [1, 1]} : vector<12x1xf32> to vector<1x1xf32>
      %177 = vector.extract_strided_slice %175 {offsets = [1, 0], sizes = [1, 1], strides = [1, 1]} : vector<12x1xf32> to vector<1x1xf32>
      %178 = vector.extract_strided_slice %175 {offsets = [2, 0], sizes = [1, 1], strides = [1, 1]} : vector<12x1xf32> to vector<1x1xf32>
      %179 = vector.extract_strided_slice %175 {offsets = [3, 0], sizes = [1, 1], strides = [1, 1]} : vector<12x1xf32> to vector<1x1xf32>
      %180 = arith.subf %178, %176 : vector<1x1xf32>
      %181 = arith.subf %179, %177 : vector<1x1xf32>
      %182 = arith.mulf %180, %181 : vector<1x1xf32>
      %183 = vector.broadcast %178 : vector<1x1xf32> to vector<1x256xf32>
      %184 = arith.minimumf %183, %86 : vector<1x256xf32>
      %185 = vector.broadcast %176 : vector<1x1xf32> to vector<1x256xf32>
      %186 = arith.maximumf %185, %72 : vector<1x256xf32>
      %187 = arith.subf %184, %186 : vector<1x256xf32>
      %cst_54 = arith.constant 0.000000e+00 : f32
      %188 = vector.broadcast %cst_54 : f32 to vector<1x256xf32>
      %189 = arith.maximumf %187, %188 : vector<1x256xf32>
      %190 = vector.broadcast %179 : vector<1x1xf32> to vector<1x256xf32>
      %191 = arith.minimumf %190, %93 : vector<1x256xf32>
      %192 = vector.broadcast %177 : vector<1x1xf32> to vector<1x256xf32>
      %193 = arith.maximumf %192, %79 : vector<1x256xf32>
      %194 = arith.subf %191, %193 : vector<1x256xf32>
      %cst_55 = arith.constant 0.000000e+00 : f32
      %195 = vector.broadcast %cst_55 : f32 to vector<1x256xf32>
      %196 = arith.maximumf %194, %195 : vector<1x256xf32>
      %197 = arith.mulf %189, %196 : vector<1x256xf32>
      %198 = vector.broadcast %182 : vector<1x1xf32> to vector<1x256xf32>
      %199 = arith.addf %198, %96 : vector<1x256xf32>
      %200 = arith.subf %199, %197 : vector<1x256xf32>
      %cst_56 = arith.constant 9.99999993E-9 : f32
      %201 = vector.broadcast %cst_56 : f32 to vector<1x256xf32>
      %202 = arith.maximumf %200, %201 : vector<1x256xf32>
      %203 = arith.divf %197, %202 : vector<1x256xf32>
      %cst_57 = arith.constant 0.00999999977 : f32
      %204 = vector.broadcast %cst_57 : f32 to vector<1x256xf32>
      %205 = arith.cmpf ole, %203, %204 : vector<1x256xf32>
      %cst_58 = arith.constant dense<true> : vector<1x256xi1>
      %206 = arith.xori %169, %cst_58 : vector<1x256xi1>
      %207 = arith.andi %205, %206 : vector<1x256xi1>
      %cst_59 = arith.constant 0xFF800000 : f32
      %208 = vector.broadcast %cst_59 : f32 to vector<1x256xf32>
      %209 = arith.select %207, %arg11, %208 : vector<1x256xi1>, vector<1x256xf32>
      %cst_60 = arith.constant dense<0xFF800000> : vector<1xf32>
      %210 = vector.multi_reduction <maximumf>, %209, %cst_60 [1] : vector<1x256xf32> to vector<1xf32>
      %211 = vector.shape_cast %210 : vector<1xf32> to vector<1x1xf32>
      %212 = vector.broadcast %arg10 : i32 to vector<1x128xi32>
      %213 = arith.cmpi eq, %107, %212 : vector<1x128xi32>
      %214 = vector.shape_cast %213 : vector<1x128xi1> to vector<1x128xi1>
      %215 = vector.broadcast %214 : vector<1x128xi1> to vector<12x128xi1>
      %216 = vector.shape_cast %175 : vector<12x1xf32> to vector<12x1xf32>
      %217 = vector.broadcast %216 : vector<12x1xf32> to vector<12x128xf32>
      %218 = arith.select %215, %217, %arg12 : vector<12x128xi1>, vector<12x128xf32>
      %c1_i32 = arith.constant 1 : i32
      %219 = arith.addi %arg10, %c1_i32 : i32
      scf.yield %219, %209, %218, %211 : i32, vector<1x256xf32>, vector<12x128xf32>, vector<1x1xf32>
    }
    %118 = vector.broadcast %117#0 : i32 to vector<1x128xi32>
    %119 = arith.cmpi slt, %107, %118 : vector<1x128xi32>
    %120 = vector.extract_strided_slice %117#2 {offsets = [0, 0], sizes = [4, 128], strides = [1, 1]} : vector<12x128xf32> to vector<4x128xf32>
    %cst_31 = arith.constant -1.000000e+00 : f32
    %121 = vector.shape_cast %119 : vector<1x128xi1> to vector<1x128xi1>
    %122 = vector.broadcast %121 : vector<1x128xi1> to vector<4x128xi1>
    %123 = vector.broadcast %cst_31 : f32 to vector<4x128xf32>
    %124 = arith.select %122, %120, %123 : vector<4x128xi1>, vector<4x128xf32>
    %c0_32 = arith.constant 0 : index
    %c0_33 = arith.constant 0 : index
    %c0_34 = arith.constant 0 : index
    %125 = vector.load %arg5[%c0_32, %c0_33, %c0_34] : memref<1x4x128xf32, #tpu.memory_space<vmem>>, vector<1x4x128xf32>
    %126 = vector.shape_cast %125 : vector<1x4x128xf32> to vector<4x128xf32>
    %127 = vector.shape_cast %124 : vector<4x128xf32> to vector<1x4x128xf32>
    tpu.vector_store %arg5[%c0_32, %c0_33, %c0_34], %127 {strides = array<i32>} : memref<1x4x128xf32, #tpu.memory_space<vmem>>, vector<1x4x128xf32>,
    %128 = vector.extract_strided_slice %117#2 {offsets = [4, 0], sizes = [1, 128], strides = [1, 1]} : vector<12x128xf32> to vector<1x128xf32>
    %129 = arith.negf %128 : vector<1x128xf32>
    %130 = math.exp %129 : vector<1x128xf32>
    %cst_35 = arith.constant 1.000000e+00 : f32
    %131 = vector.broadcast %cst_35 : f32 to vector<1x128xf32>
    %132 = arith.addf %131, %130 : vector<1x128xf32>
    %133 = arith.divf %131, %132 : vector<1x128xf32>
    %cst_36 = arith.constant -1.000000e+00 : f32
    %134 = vector.broadcast %cst_36 : f32 to vector<1x128xf32>
    %135 = arith.select %119, %133, %134 : vector<1x128xi1>, vector<1x128xf32>
    %c0_37 = arith.constant 0 : index
    %c0_38 = arith.constant 0 : index
    %c0_39 = arith.constant 0 : index
    %136 = vector.load %arg6[%c0_37, %c0_38, %c0_39] : memref<1x1x128xf32, #tpu.memory_space<vmem>>, vector<1x1x128xf32>
    %137 = vector.shape_cast %136 : vector<1x1x128xf32> to vector<1x128xf32>
    %138 = vector.shape_cast %135 : vector<1x128xf32> to vector<1x1x128xf32>
    tpu.vector_store %arg6[%c0_37, %c0_38, %c0_39], %138 {strides = array<i32>} : memref<1x1x128xf32, #tpu.memory_space<vmem>>, vector<1x1x128xf32>,
    %139 = vector.extract_strided_slice %117#2 {offsets = [5, 0], sizes = [1, 128], strides = [1, 1]} : vector<12x128xf32> to vector<1x128xf32>
    %140 = arith.fptosi %139 : vector<1x128xf32> to vector<1x128xi32>
    %c-1_i32 = arith.constant -1 : i32
    %141 = vector.broadcast %c-1_i32 : i32 to vector<1x128xi32>
    %142 = arith.select %119, %140, %141 : vector<1x128xi1>, vector<1x128xi32>
    %c0_40 = arith.constant 0 : index
    %c0_41 = arith.constant 0 : index
    %c0_42 = arith.constant 0 : index
    %143 = vector.load %arg7[%c0_40, %c0_41, %c0_42] : memref<1x1x128xi32, #tpu.memory_space<vmem>>, vector<1x1x128xi32>
    %144 = vector.shape_cast %143 : vector<1x1x128xi32> to vector<1x128xi32>
    %145 = vector.shape_cast %142 : vector<1x128xi32> to vector<1x1x128xi32>
    tpu.vector_store %arg7[%c0_40, %c0_41, %c0_42], %145 {strides = array<i32>} : memref<1x1x128xi32, #tpu.memory_space<vmem>>, vector<1x1x128xi32>,
    %146 = vector.extract_strided_slice %117#2 {offsets = [6, 0], sizes = [3, 128], strides = [1, 1]} : vector<12x128xf32> to vector<3x128xf32>
    %cst_43 = arith.constant -1.000000e+00 : f32
    %147 = vector.shape_cast %119 : vector<1x128xi1> to vector<1x128xi1>
    %148 = vector.broadcast %147 : vector<1x128xi1> to vector<3x128xi1>
    %149 = vector.broadcast %cst_43 : f32 to vector<3x128xf32>
    %150 = arith.select %148, %146, %149 : vector<3x128xi1>, vector<3x128xf32>
    %c0_44 = arith.constant 0 : index
    %c0_45 = arith.constant 0 : index
    %c0_46 = arith.constant 0 : index
    %151 = vector.load %arg8[%c0_44, %c0_45, %c0_46] : memref<1x3x128xf32, #tpu.memory_space<vmem>>, vector<1x3x128xf32>
    %152 = vector.shape_cast %151 : vector<1x3x128xf32> to vector<3x128xf32>
    %153 = vector.shape_cast %150 : vector<3x128xf32> to vector<1x3x128xf32>
    tpu.vector_store %arg8[%c0_44, %c0_45, %c0_46], %153 {strides = array<i32>} : memref<1x3x128xf32, #tpu.memory_space<vmem>>, vector<1x3x128xf32>,
    %154 = vector.extract_strided_slice %117#2 {offsets = [9, 0], sizes = [3, 128], strides = [1, 1]} : vector<12x128xf32> to vector<3x128xf32>
    %cst_47 = arith.constant -1.000000e+00 : f32
    %155 = vector.shape_cast %119 : vector<1x128xi1> to vector<1x128xi1>
    %156 = vector.broadcast %155 : vector<1x128xi1> to vector<3x128xi1>
    %157 = vector.broadcast %cst_47 : f32 to vector<3x128xf32>
    %158 = arith.select %156, %154, %157 : vector<3x128xi1>, vector<3x128xf32>
    %c0_48 = arith.constant 0 : index
    %c0_49 = arith.constant 0 : index
    %c0_50 = arith.constant 0 : index
    %159 = vector.load %arg9[%c0_48, %c0_49, %c0_50] : memref<1x3x128xf32, #tpu.memory_space<vmem>>, vector<1x3x128xf32>
    %160 = vector.shape_cast %159 : vector<1x3x128xf32> to vector<3x128xf32>
    %161 = vector.shape_cast %158 : vector<3x128xf32> to vector<1x3x128xf32>
    tpu.vector_store %arg9[%c0_48, %c0_49, %c0_50], %161 {strides = array<i32>} : memref<1x3x128xf32, #tpu.memory_space<vmem>>, vector<1x3x128xf32>,
    return
  }
  func.func @transform_0(%arg0: i32) -> (i32, i32, i32) {
    %c0_i32 = arith.constant 0 : i32
    %c0_i32_0 = arith.constant 0 : i32
    %c0_i32_1 = arith.constant 0 : i32
    return %arg0, %c0_i32, %c0_i32_0 : i32, i32, i32
  }
  func.func @transform_1(%arg0: i32) -> (i32, i32) {
    %c0_i32 = arith.constant 0 : i32
    %c0_i32_0 = arith.constant 0 : i32
    %c0_i32_1 = arith.constant 0 : i32
    return %c0_i32, %c0_i32_0 : i32, i32
  }
  func.func @transform_2(%arg0: i32) -> (i32, i32) {
    %c0_i32 = arith.constant 0 : i32
    %c0_i32_0 = arith.constant 0 : i32
    %c0_i32_1 = arith.constant 0 : i32
    return %c0_i32, %c0_i32_0 : i32, i32
  }
  func.func @transform_3(%arg0: i32) -> (i32, i32) {
    %c0_i32 = arith.constant 0 : i32
    %c0_i32_0 = arith.constant 0 : i32
    %c0_i32_1 = arith.constant 0 : i32
    return %c0_i32, %c0_i32_0 : i32, i32
  }
  func.func @transform_4(%arg0: i32) -> (i32, i32, i32) {
    %c0_i32 = arith.constant 0 : i32
    %c0_i32_0 = arith.constant 0 : i32
    %c0_i32_1 = arith.constant 0 : i32
    return %arg0, %c0_i32, %c0_i32_0 : i32, i32, i32
  }
  func.func @transform_5(%arg0: i32) -> (i32, i32, i32) {
    %c0_i32 = arith.constant 0 : i32
    %c0_i32_0 = arith.constant 0 : i32
    %c0_i32_1 = arith.constant 0 : i32
    return %arg0, %c0_i32, %c0_i32_0 : i32, i32, i32
  }
  func.func @transform_6(%arg0: i32) -> (i32, i32, i32) {
    %c0_i32 = arith.constant 0 : i32
    %c0_i32_0 = arith.constant 0 : i32
    %c0_i32_1 = arith.constant 0 : i32
    return %arg0, %c0_i32, %c0_i32_0 : i32, i32, i32
  }
  func.func @transform_7(%arg0: i32) -> (i32, i32, i32) {
    %c0_i32 = arith.constant 0 : i32
    %c0_i32_0 = arith.constant 0 : i32
    %c0_i32_1 = arith.constant 0 : i32
    return %arg0, %c0_i32, %c0_i32_0 : i32, i32, i32
  }
  func.func @transform_8(%arg0: i32) -> (i32, i32, i32) {
    %c0_i32 = arith.constant 0 : i32
    %c0_i32_0 = arith.constant 0 : i32
    %c0_i32_1 = arith.constant 0 : i32
    return %arg0, %c0_i32, %c0_i32_0 : i32, i32, i32
  }
}

</mosaic_0001>

<llo_original>
// kernel: forward.1
$region0: #{forward.1}
  #allocation0 [shape = 'u32[]', space=smem, size = 0x4, offset = 0x4, fixed_abs, tag = 'smem constant byte address 0x4 - core index']
  #allocation1 [shape = 'u32[72,128]{1,0:T(1,128)}', space=vmem, size = 0x9000, scoped, tag = 'internal scratch']
  %s0 = inlined_call_operand.vmem [shape: f32[2,4,256], index: 0, kind: input, shape index: {}]
  %s1 = inlined_call_operand.vmem [shape: f32[18,4], index: 1, kind: input, shape index: {}]
  %s2 = inlined_call_operand.vmem [shape: f32[18,1], index: 2, kind: input, shape index: {}]
  %s3 = inlined_call_operand.vmem [shape: f32[4,256], index: 3, kind: input, shape index: {}]
  %s4 = inlined_call_operand.vmem [shape: f32[2,4,128], index: 4, kind: output, shape index: {0}]
  %s5 = inlined_call_operand.hbm [shape: f32[2,1,128], index: 5, kind: output, shape index: {1}]
  %s6 = inlined_call_operand.hbm [shape: s32[2,1,128], index: 6, kind: output, shape index: {2}]
  %s7 = inlined_call_operand.vmem [shape: f32[2,3,128], index: 7, kind: output, shape index: {3}]
  %s8 = inlined_call_operand.vmem [shape: f32[2,3,128], index: 8, kind: output, shape index: {4}]
  %9 = xla_tuple %s4, %s5, %s6, %s7, %s8
  %s10 = sld [smem:[#allocation0]]
  $region88: #{forward.1} parent=0
    _
  %s12 = ssub.s32 1, %s10
  %s13 = scalar_select 0, %s12, %s10
  $region1: #{forward.1} parent=0
    #allocation2 [shape = 'u8[1024]{0}', space=vmem, size = 0x400, scoped, tag = 'output window, operand 1']
    #allocation3 [shape = 's32[2]{0}', space=sflag, size = 0x8, scoped, tag = 'scoped memory for forward.1']
    #allocation4 [shape = 'u8[1024]{0}', space=vmem, size = 0x400, scoped, tag = 'output window, operand 2']
    #allocation5 [shape = 's32[2]{0}', space=sflag, size = 0x8, scoped, tag = 'scoped memory for forward.1']
    %14 = vsyncpa [#allocation3], 0
    %s15 = scalar_lea.sflag [#allocation3], 1
    %16 = vsyncpa %s15, 0
    %17 = vsyncpa [#allocation5], 0
    %s18 = scalar_lea.sflag [#allocation5], 1
    %19 = vsyncpa %s18, 0
    loop: start=0, step=1, limit=4
    $region2: #{forward.1} parent=1 // loop_pre_header
      _
    $region3: #{forward.1} parent=1 // loop_header
      %s21 = sphi 0, %s25
      %p22 = scmp.ge.s32.totalorder %s21, 4
      %s31 = sphi 0, %s33
      %s34 = sphi 0, %s31
      %s35 = sphi 0, %s34
      %s51 = sphi 0, %s35
      %s55 = sphi 0, %s55
      %s57 = sphi 0, %s55
      %s58 = sphi 0, %s57
      %s72 = sphi 0, %s58
      %s76 = sphi 0, %s76
      %s78 = sphi 0, %s76
      %s79 = sphi 0, %s78
      %s93 = sphi 0, %s79
      %s97 = sphi 0, %s97
      %s99 = sphi 0, %s97
      %s100 = sphi 0, %s99
      %s114 = sphi 0, %s100
      %s120 = sphi 0, %s122
      %s123 = sphi 0, %s120
      %s124 = sphi 0, %s123
      %s140 = sphi 0, %s124
      %s146 = sphi 0, %s148
      %s149 = sphi 0, %s146
      %s150 = sphi 0, %s149
      %s166 = sphi 0, %s150
      %s172 = sphi 0, %s174
      %s175 = sphi 0, %s172
      %s176 = sphi 0, %s175
      %s192 = sphi 0, %s176
      %s198 = sphi 0, %s200
      %s201 = sphi 0, %s198
      %s202 = sphi 0, %s201
      %s218 = sphi 0, %s202
      %s224 = sphi 0, %s226
      %s227 = sphi 0, %s224
      %s228 = sphi 0, %s227
      %s244 = sphi 0, %s228
    $region4: #{forward.1} parent=1 // loop_header_branch
      %24 = sbr.rel (%p22) target = $region8
    $region5: #{forward.1} parent=1 // loop_body
      %s26 = ssub.s32 %s21, 1
      %s27 = ssub.s32 %s21, 2
      %s28 = sadd.s32 %s21, 1
      %s29 = ssub.s32 %s21, %s28
      %p30 = scmp.eq.s32.totalorder %s29, 0
      %s32 = sadd.s32 %s31, 1
      %s33 = scalar_select %p30, %s31, %s32
      %p36 = pneg %p30
      %p37 = scmp.eq.s32.totalorder %s21, 1
      %p38 = por %p36, %p37
      %p39 = scmp.ne.s32.totalorder %s31, %s34
      %p40 = scmp.eq.s32.totalorder %s21, 0
      %p41 = por %p39, %p40
      %p42 = scmp.ne.s32.totalorder %s31, %s34
      %p43 = scmp.eq.s32.totalorder %s26, 1
      %p44 = por %p42, %p43
      %p45 = scmp.ne.s32.totalorder %s34, %s35
      %p46 = scmp.eq.s32.totalorder %s26, 0
      %p47 = por %p45, %p46
      %p48 = scmp.ne.s32.totalorder %s34, %s35
      %p49 = scmp.eq.s32.totalorder %s27, 1
      %p50 = por %p48, %p49
      %p52 = scmp.ne.s32.totalorder %s35, %s51
      %p53 = scmp.eq.s32.totalorder %s27, 0
      %p54 = por %p52, %p53
      %s56 = sadd.s32 %s55, 1
      %p59 = scmp.eq.s32.totalorder %s21, 1
      %p60 = scmp.ne.s32.totalorder %s55, %s57
      %p61 = scmp.eq.s32.totalorder %s21, 0
      %p62 = por %p60, %p61
      %p63 = scmp.ne.s32.totalorder %s55, %s57
      %p64 = scmp.eq.s32.totalorder %s26, 1
      %p65 = por %p63, %p64
      %p66 = scmp.ne.s32.totalorder %s57, %s58
      %p67 = scmp.eq.s32.totalorder %s26, 0
      %p68 = por %p66, %p67
      %p69 = scmp.ne.s32.totalorder %s57, %s58
      %p70 = scmp.eq.s32.totalorder %s27, 1
      %p71 = por %p69, %p70
      %p73 = scmp.ne.s32.totalorder %s58, %s72
      %p74 = scmp.eq.s32.totalorder %s27, 0
      %p75 = por %p73, %p74
      %s77 = sadd.s32 %s76, 1
      %p80 = scmp.eq.s32.totalorder %s21, 1
      %p81 = scmp.ne.s32.totalorder %s76, %s78
      %p82 = scmp.eq.s32.totalorder %s21, 0
      %p83 = por %p81, %p82
      %p84 = scmp.ne.s32.totalorder %s76, %s78
      %p85 = scmp.eq.s32.totalorder %s26, 1
      %p86 = por %p84, %p85
      %p87 = scmp.ne.s32.totalorder %s78, %s79
      %p88 = scmp.eq.s32.totalorder %s26, 0
      %p89 = por %p87, %p88
      %p90 = scmp.ne.s32.totalorder %s78, %s79
      %p91 = scmp.eq.s32.totalorder %s27, 1
      %p92 = por %p90, %p91
      %p94 = scmp.ne.s32.totalorder %s79, %s93
      %p95 = scmp.eq.s32.totalorder %s27, 0
      %p96 = por %p94, %p95
      %s98 = sadd.s32 %s97, 1
      %p101 = scmp.eq.s32.totalorder %s21, 1
      %p102 = scmp.ne.s32.totalorder %s97, %s99
      %p103 = scmp.eq.s32.totalorder %s21, 0
      %p104 = por %p102, %p103
      %p105 = scmp.ne.s32.totalorder %s97, %s99
      %p106 = scmp.eq.s32.totalorder %s26, 1
      %p107 = por %p105, %p106
      %p108 = scmp.ne.s32.totalorder %s99, %s100
      %p109 = scmp.eq.s32.totalorder %s26, 0
      %p110 = por %p108, %p109
      %p111 = scmp.ne.s32.totalorder %s99, %s100
      %p112 = scmp.eq.s32.totalorder %s27, 1
      %p113 = por %p111, %p112
      %p115 = scmp.ne.s32.totalorder %s100, %s114
      %p116 = scmp.eq.s32.totalorder %s27, 0
      %p117 = por %p115, %p116
      %s118 = ssub.s32 %s21, %s28
      %p119 = scmp.eq.s32.totalorder %s118, 0
      %s121 = sadd.s32 %s120, 1
      %s122 = scalar_select %p119, %s120, %s121
      %p125 = pneg %p119
      %p126 = scmp.eq.s32.totalorder %s21, 1
      %p127 = por %p125, %p126
      %p128 = scmp.ne.s32.totalorder %s120, %s123
      %p129 = scmp.eq.s32.totalorder %s21, 0
      %p130 = por %p128, %p129
      %p131 = scmp.ne.s32.totalorder %s120, %s123
      %p132 = scmp.eq.s32.totalorder %s26, 1
      %p133 = por %p131, %p132
      %p134 = scmp.ne.s32.totalorder %s123, %s124
      %p135 = scmp.eq.s32.totalorder %s26, 0
      %p136 = por %p134, %p135
      %p137 = scmp.ne.s32.totalorder %s123, %s124
      %p138 = scmp.eq.s32.totalorder %s27, 1
      %p139 = por %p137, %p138
      %p141 = scmp.ne.s32.totalorder %s124, %s140
      %p142 = scmp.eq.s32.totalorder %s27, 0
      %p143 = por %p141, %p142
      %s144 = ssub.s32 %s21, %s28
      %p145 = scmp.eq.s32.totalorder %s144, 0
      %s147 = sadd.s32 %s146, 1
      %s148 = scalar_select %p145, %s146, %s147
      %p151 = pneg %p145
      %p152 = scmp.eq.s32.totalorder %s21, 1
      %p153 = por %p151, %p152
      %p154 = scmp.ne.s32.totalorder %s146, %s149
      %p155 = scmp.eq.s32.totalorder %s21, 0
      %p156 = por %p154, %p155
      %p157 = scmp.ne.s32.totalorder %s146, %s149
      %p158 = scmp.eq.s32.totalorder %s26, 1
      %p159 = por %p157, %p158
      %p160 = scmp.ne.s32.totalorder %s149, %s150
      %p161 = scmp.eq.s32.totalorder %s26, 0
      %p162 = por %p160, %p161
      %p163 = scmp.ne.s32.totalorder %s149, %s150
      %p164 = scmp.eq.s32.totalorder %s27, 1
      %p165 = por %p163, %p164
      %p167 = scmp.ne.s32.totalorder %s150, %s166
      %p168 = scmp.eq.s32.totalorder %s27, 0
      %p169 = por %p167, %p168
      %s170 = ssub.s32 %s21, %s28
      %p171 = scmp.eq.s32.totalorder %s170, 0
      %s173 = sadd.s32 %s172, 1
      %s174 = scalar_select %p171, %s172, %s173
      %p177 = pneg %p171
      %p178 = scmp.eq.s32.totalorder %s21, 1
      %p179 = por %p177, %p178
      %p180 = scmp.ne.s32.totalorder %s172, %s175
      %p181 = scmp.eq.s32.totalorder %s21, 0
      %p182 = por %p180, %p181
      %p183 = scmp.ne.s32.totalorder %s172, %s175
      %p184 = scmp.eq.s32.totalorder %s26, 1
      %p185 = por %p183, %p184
      %p186 = scmp.ne.s32.totalorder %s175, %s176
      %p187 = scmp.eq.s32.totalorder %s26, 0
      %p188 = por %p186, %p187
      %p189 = scmp.ne.s32.totalorder %s175, %s176
      %p190 = scmp.eq.s32.totalorder %s27, 1
      %p191 = por %p189, %p190
      %p193 = scmp.ne.s32.totalorder %s176, %s192
      %p194 = scmp.eq.s32.totalorder %s27, 0
      %p195 = por %p193, %p194
      %s196 = ssub.s32 %s21, %s28
      %p197 = scmp.eq.s32.totalorder %s196, 0
      %s199 = sadd.s32 %s198, 1
      %s200 = scalar_select %p197, %s198, %s199
      %p203 = pneg %p197
      %p204 = scmp.eq.s32.totalorder %s21, 1
      %p205 = por %p203, %p204
      %p206 = scmp.ne.s32.totalorder %s198, %s201
      %p207 = scmp.eq.s32.totalorder %s21, 0
      %p208 = por %p206, %p207
      %p209 = scmp.ne.s32.totalorder %s198, %s201
      %p210 = scmp.eq.s32.totalorder %s26, 1
      %p211 = por %p209, %p210
      %p212 = scmp.ne.s32.totalorder %s201, %s202
      %p213 = scmp.eq.s32.totalorder %s26, 0
      %p214 = por %p212, %p213
      %p215 = scmp.ne.s32.totalorder %s201, %s202
      %p216 = scmp.eq.s32.totalorder %s27, 1
      %p217 = por %p215, %p216
      %p219 = scmp.ne.s32.totalorder %s202, %s218
      %p220 = scmp.eq.s32.totalorder %s27, 0
      %p221 = por %p219, %p220
      %s222 = ssub.s32 %s21, %s28
      %p223 = scmp.eq.s32.totalorder %s222, 0
      %s225 = sadd.s32 %s224, 1
      %s226 = scalar_select %p223, %s224, %s225
      %p229 = pneg %p223
      %p230 = scmp.eq.s32.totalorder %s21, 1
      %p231 = por %p229, %p230
      %p232 = scmp.ne.s32.totalorder %s224, %s227
      %p233 = scmp.eq.s32.totalorder %s21, 0
      %p234 = por %p232, %p233
      %p235 = scmp.ne.s32.totalorder %s224, %s227
      %p236 = scmp.eq.s32.totalorder %s26, 1
      %p237 = por %p235, %p236
      %p238 = scmp.ne.s32.totalorder %s227, %s228
      %p239 = scmp.eq.s32.totalorder %s26, 0
      %p240 = por %p238, %p239
      %p241 = scmp.ne.s32.totalorder %s227, %s228
      %p242 = scmp.eq.s32.totalorder %s27, 1
      %p243 = por %p241, %p242
      %p245 = scmp.ne.s32.totalorder %s228, %s244
      %p246 = scmp.eq.s32.totalorder %s27, 0
      %p247 = por %p245, %p246
      %p248 = scmp.le.s32.totalorder 1, %s21
      %p249 = scmp.lt.s32.totalorder %s21, 3
      %p250 = pnand %p248, %p249
      %p251 = pneg %p250
      // Predicated region
      $region9: #{forward.1} parent=5 // pred_check
        _
      $region10: #{forward.1} parent=5 // pred_check_branch
        %253 = sbr.rel (%p250) target = $region12
      $region11: #{forward.1} parent=5 // pred_region
        %s254 = ssub.s32 %s21, 1
        // Predicated region
        $region13: #{forward.1} parent=11 // pred_check
          %p255 = pneg %p68
        $region14: #{forward.1} parent=11 // pred_check_branch
          %257 = sbr.rel (%p255) target = $region16
        $region15: #{forward.1} parent=11 // pred_region
          _
        $region16: #{forward.1} parent=11 // pred_fallthru
          _
        // Predicated region
        $region17: #{forward.1} parent=11 // pred_check
          %p258 = pneg %p89
        $region18: #{forward.1} parent=11 // pred_check_branch
          %260 = sbr.rel (%p258) target = $region20
        $region19: #{forward.1} parent=11 // pred_region
          _
        $region20: #{forward.1} parent=11 // pred_fallthru
          _
        // Predicated region
        $region21: #{forward.1} parent=11 // pred_check
          %p261 = pneg %p110
        $region22: #{forward.1} parent=11 // pred_check_branch
          %263 = sbr.rel (%p261) target = $region24
        $region23: #{forward.1} parent=11 // pred_region
          _
        $region24: #{forward.1} parent=11 // pred_fallthru
          _
      $region12: #{forward.1} parent=5 // pred_fallthru
        _
      %p264 = scmp.lt.s32.totalorder %s21, 2
      // Predicated region
      $region25: #{forward.1} parent=5 // pred_check
        %p265 = pneg %p264
      $region26: #{forward.1} parent=5 // pred_check_branch
        %267 = sbr.rel (%p265) target = $region28
      $region27: #{forward.1} parent=5 // pred_region
        // Predicated region
        $region29: #{forward.1} parent=27 // pred_check
          %p268 = pneg %p41
        $region30: #{forward.1} parent=27 // pred_check_branch
          %270 = sbr.rel (%p268) target = $region32
        $region31: #{forward.1} parent=27 // pred_region
          %p271 = scmp.lt.s32.totalorder %s21, 1
          %s272 = scalar_select %p271, %s21, 1
          %s273 = smul.addr %s272, 2
          %s274 = smul.addr %s273, 4
          %s275 = scalar_lea.vmem %s0, %s274
        $region32: #{forward.1} parent=27 // pred_fallthru
          _
      $region28: #{forward.1} parent=5 // pred_fallthru
        _
      %p276 = scmp.le.s32.totalorder 1, %s21
      %p277 = scmp.lt.s32.totalorder %s21, 3
      %p278 = pnand %p276, %p277
      %p279 = pneg %p278
      // Predicated region
      $region33: #{forward.1} parent=5 // pred_check
        _
      $region34: #{forward.1} parent=5 // pred_check_branch
        %281 = sbr.rel (%p278) target = $region36
      $region35: #{forward.1} parent=5 // pred_region
        %s282 = ssub.s32 %s21, 1
        %p283 = scmp.lt.s32.totalorder %s26, 1
        %s284 = scalar_select %p283, %s26, 1
        %s285 = smul.addr %s284, 2
        %s286 = smul.addr %s285, 4
        %s287 = scalar_lea.vmem %s0, %s286
        %p288 = pneg %p47
        %p289 = pneg %p44
        %p290 = pneg %p68
        %p291 = pneg %p65
        %p292 = pneg %p89
        %p293 = pneg %p86
        %p294 = pneg %p110
        %p295 = pneg %p107
        %p296 = pneg %p136
        %p297 = pneg %p133
        %p298 = scmp.lt.s32.totalorder %s26, 1
        %s299 = scalar_select %p298, %s26, 1
        %s300 = smul.addr %s299, 4
        %s301 = scalar_lea.vmem %s4, %s300
        %p302 = pneg %p162
        %p303 = pneg %p159
        %s304 = sand.u32 %s149, 1
        %s305 = scalar_lea.sflag [#allocation3], %s304
        %s306 = sand.u32 %s149, 1
        %s307 = scalar_lea.vmem [#allocation2], %s306
        %p308 = pneg %p188
        %p309 = pneg %p185
        %s310 = sand.u32 %s175, 1
        %s311 = scalar_lea.sflag [#allocation5], %s310
        %s312 = sand.u32 %s175, 1
        %s313 = scalar_lea.vmem [#allocation4], %s312
        %p314 = pneg %p214
        %p315 = pneg %p211
        %p316 = scmp.lt.s32.totalorder %s26, 1
        %s317 = scalar_select %p316, %s26, 1
        %s318 = smul.addr %s317, 4
        %s319 = scalar_lea.vmem %s7, %s318
        %p320 = pneg %p240
        %p321 = pneg %p237
        %p322 = scmp.lt.s32.totalorder %s26, 1
        %s323 = scalar_select %p322, %s26, 1
        %s324 = smul.addr %s323, 4
        %s325 = scalar_lea.vmem %s8, %s324
        %p326 = scmp.lt.s32.totalorder %s26, 1
        %s327 = scalar_select %p326, %s26, 1
        %s328 = smul.addr %s327, 2
        %s329 = smul.addr %s328, 4
        %s330 = scalar_lea.vmem %s0, %s329
        %p331 = scmp.lt.s32.totalorder %s26, 1
        %s332 = scalar_select %p331, %s26, 1
        %s333 = smul.addr %s332, 4
        %s334 = scalar_lea.vmem %s4, %s333
        %p335 = scmp.lt.s32.totalorder %s26, 1
        %s336 = scalar_select %p335, %s26, 1
        %s337 = smul.addr %s336, 4
        %s338 = scalar_lea.vmem %s7, %s337
        %p339 = scmp.lt.s32.totalorder %s26, 1
        %s340 = scalar_select %p339, %s26, 1
        %s341 = smul.addr %s340, 4
        %s342 = scalar_lea.vmem %s8, %s341
        %v343 = vld [vmem:[%s330] sm:$0xff]
        %v344 = vld [vmem:[%s1] sm:$0xff]
        %v345 = vld [vmem:[%s1 + $0x8] sm:$0xff]
        %v346 = vld [vmem:[%s1 + $0x10] sm:$0x3]
        %v347 = vld [vmem:[%s2] sm:$0xff]
        %v348 = vld [vmem:[%s2 + $0x8] sm:$0xff]
        %v349 = vld [vmem:[%s2 + $0x10] sm:$0x3]
        %351 = vset.pattern.permute.xlu0 0
        %352 = vperm.xlu0 %351, %v344
        %v353 = vpop.permute.xlu0 %352
        %356 = vset.pattern.permute.xlu0 0
        %357 = vperm.xlu0 %356, %v345
        %v358 = vpop.permute.xlu0 %357
        %361 = vset.pattern.permute.xlu0 0
        %362 = vperm.xlu0 %361, %v346
        %v363 = vpop.permute.xlu0 %362
        %v366 = vperm.slane %v343, 0
        %v367 = vperm.slane %v343, 4
        %v370 = vperm.slane %v366, 0
        %v371 = vperm.slane %v367, 0
        %v372 = vmul.f32 %v353, %v370
        %v373 = vmul.f32 %v353, %v371
        %v374 = vmul.f32 %v358, %v370
        %v375 = vmul.f32 %v358, %v371
        %v376 = vmul.f32 %v363, %v370
        %v377 = vmul.f32 %v363, %v371
        %379 = vset.pattern.permute.xlu0 0
        %380 = vperm.xlu0 %379, %v347
        %v381 = vpop.permute.xlu0 %380
        %384 = vset.pattern.permute.xlu0 0
        %385 = vperm.xlu0 %384, %v348
        %v386 = vpop.permute.xlu0 %385
        %389 = vset.pattern.permute.xlu0 0
        %390 = vperm.xlu0 %389, %v349
        %v391 = vpop.permute.xlu0 %390
        %v393 = vadd.f32 %v381, %v372
        %v394 = vadd.f32 %v381, %v373
        %v395 = vadd.f32 %v386, %v374
        %v396 = vadd.f32 %v386, %v375
        %v397 = vadd.f32 %v391, %v376
        %v398 = vadd.f32 %v391, %v377
        %399 = vset.pattern.permute.xlu0 1
        %400 = vperm.xlu0 %399, %v344
        %v401 = vpop.permute.xlu0 %400
        %403 = vset.pattern.permute.xlu0 1
        %404 = vperm.xlu0 %403, %v345
        %v405 = vpop.permute.xlu0 %404
        %407 = vset.pattern.permute.xlu0 1
        %408 = vperm.xlu0 %407, %v346
        %v409 = vpop.permute.xlu0 %408
        %v411 = vperm.slane %v343, 1
        %v412 = vperm.slane %v343, 5
        %v415 = vperm.slane %v411, 1
        %v416 = vperm.slane %v412, 1
        %v417 = vmul.f32 %v401, %v415
        %v418 = vmul.f32 %v401, %v416
        %v419 = vmul.f32 %v405, %v415
        %v420 = vmul.f32 %v405, %v416
        %v421 = vmul.f32 %v409, %v415
        %v422 = vmul.f32 %v409, %v416
        %v423 = vadd.f32 %v393, %v417
        %v424 = vadd.f32 %v394, %v418
        %v425 = vadd.f32 %v395, %v419
        %v426 = vadd.f32 %v396, %v420
        %v427 = vadd.f32 %v397, %v421
        %v428 = vadd.f32 %v398, %v422
        %429 = vset.pattern.permute.xlu0 2
        %430 = vperm.xlu0 %429, %v344
        %v431 = vpop.permute.xlu0 %430
        %433 = vset.pattern.permute.xlu0 2
        %434 = vperm.xlu0 %433, %v345
        %v435 = vpop.permute.xlu0 %434
        %437 = vset.pattern.permute.xlu0 2
        %438 = vperm.xlu0 %437, %v346
        %v439 = vpop.permute.xlu0 %438
        %v441 = vperm.slane %v343, 2
        %v442 = vperm.slane %v343, 6
        %v445 = vperm.slane %v441, 2
        %v446 = vperm.slane %v442, 2
        %v447 = vmul.f32 %v431, %v445
        %v448 = vmul.f32 %v431, %v446
        %v449 = vmul.f32 %v435, %v445
        %v450 = vmul.f32 %v435, %v446
        %v451 = vmul.f32 %v439, %v445
        %v452 = vmul.f32 %v439, %v446
        %v453 = vadd.f32 %v423, %v447
        %v454 = vadd.f32 %v424, %v448
        %v455 = vadd.f32 %v425, %v449
        %v456 = vadd.f32 %v426, %v450
        %v457 = vadd.f32 %v427, %v451
        %v458 = vadd.f32 %v428, %v452
        %459 = vset.pattern.permute.xlu0 3
        %460 = vperm.xlu0 %459, %v344
        %v461 = vpop.permute.xlu0 %460
        %463 = vset.pattern.permute.xlu0 3
        %464 = vperm.xlu0 %463, %v345
        %v465 = vpop.permute.xlu0 %464
        %467 = vset.pattern.permute.xlu0 3
        %468 = vperm.xlu0 %467, %v346
        %v469 = vpop.permute.xlu0 %468
        %v471 = vperm.slane %v343, 3
        %v472 = vperm.slane %v343, 7
        %v475 = vperm.slane %v471, 3
        %v476 = vperm.slane %v472, 3
        %v477 = vmul.f32 %v461, %v475
        %v478 = vmul.f32 %v461, %v476
        %v479 = vmul.f32 %v465, %v475
        %v480 = vmul.f32 %v465, %v476
        %v481 = vmul.f32 %v469, %v475
        %v482 = vmul.f32 %v469, %v476
        %v483 = vadd.f32 %v453, %v477
        %v484 = vadd.f32 %v454, %v478
        %v485 = vadd.f32 %v455, %v479
        %v486 = vadd.f32 %v456, %v480
        %v487 = vadd.f32 %v457, %v481
        %v488 = vadd.f32 %v458, %v482
        %v489 = vld [vmem:[%s3] sm:$0xff]
        %v491 = vrot.slane %v489, 6
        %v493 = vsub.f32 %v489, %v491
        %v494 = vmul.f32 %v493, 0.5
        %v496 = vrot.slane %v494, 6
        %v497 = vrot.slane %v496, 4
        %v499 = vadd.f32 %v489, %v497
        %v501 = vperm.slane %v493, 2
        %v502 = vperm.slane %v493, 6
        %v505 = vmul.f32 %v485, %v501
        %v506 = vmul.f32 %v486, %v502
        %v507 = vmul.f32 %v505, 0.1
        %v508 = vmul.f32 %v506, 0.1
        %v511 = vrot.slane %v508, 4
        %vm512 = vcmask 1043456
        %v513 = vsel %vm512, %v507, %v511
        %v515 = vadd.f32 %v499, %v513
        %v516 = vperm.slane %v493, 3
        %v517 = vperm.slane %v493, 7
        %v520 = vmul.f32 %v485, %v516
        %v521 = vmul.f32 %v486, %v517
        %v522 = vmul.f32 %v520, 0.1
        %v523 = vmul.f32 %v521, 0.1
        %v526 = vrot.slane %v523, 4
        %v527 = vsel %vm512, %v522, %v526
        %v529 = vadd.f32 %v499, %v527
        %v530 = vmul.f32 %v485, 0.2
        %v531 = vmul.f32 %v486, 0.2
        %v532 = vmul.f32 %v530, 1.442695
        %v533 = vpow.pop %v532
        %v534 = vmul.f32 %v531, 1.442695
        %v535 = vpow.pop %v534
        %v538 = vrot.slane %v535, 4
        %v539 = vsel %vm512, %v533, %v538
        %v541 = vmul.f32 %v493, %v539
        %v542 = vmul.f32 %v541, 0.5
        %v544 = vrot.slane %v542, 6
        %v545 = vrot.slane %v544, 4
        %v547 = vsub.f32 %v515, %v545
        %v548 = vmax.f32 %v547, 0.0
        %v549 = vmin.f32 %v548, 127.0
        %v550 = vsub.f32 %v529, %v545
        %v551 = vmax.f32 %v550, 0.0
        %v552 = vmin.f32 %v551, 127.0
        %v553 = vadd.f32 %v515, %v545
        %v554 = vmax.f32 %v553, 0.0
        %v555 = vmin.f32 %v554, 127.0
        %v556 = vadd.f32 %v529, %v545
        %v557 = vmax.f32 %v556, 0.0
        %v558 = vmin.f32 %v557, 127.0
        %v559 = vsub.f32 %v555, %v549
        %v560 = vsub.f32 %v558, %v552
        %v562 = vrot.slane %v560, 5
        %v563 = vrot.slane %v562, 4
        %v565 = vmul.f32 %v559, %v563
        %v566 = vrot.slane %v483, 4
        %v567 = vmax.f32 %v483, %v566
        %v568 = vrot.slane %v567, 2
        %v569 = vmax.f32 %v567, %v568
        %v570 = vrot.slane %v569, 1
        %v571 = vmax.f32 %v569, %v570
        %v572 = vrot.slane %v484, 4
        %v573 = vmax.f32 %v484, %v572
        %v574 = vrot.slane %v573, 2
        %v575 = vmax.f32 %v573, %v574
        %v576 = vrot.slane %v575, 1
        %v577 = vmax.f32 %v575, %v576
        %v578 = vlaneseq
        %v579 = vshrl.u32 %v578, 7
        %vm580 = vcmp.eq.f32.partialorder %v483, %v571
        %vm581 = vcmp.eq.f32.partialorder %v484, %v577
        %v582 = vsel %vm580, %v579, 8
        %v583 = vsel %vm581, %v579, 8
        %v584 = vrot.slane %v582, 4
        %vm585 = vcmp.lt.s32.totalorder %v582, %v584
        %v586 = vsel %vm585, %v582, %v584
        %v587 = vrot.slane %v586, 2
        %vm588 = vcmp.lt.s32.totalorder %v586, %v587
        %v589 = vsel %vm588, %v586, %v587
        %v590 = vrot.slane %v589, 1
        %vm591 = vcmp.lt.s32.totalorder %v589, %v590
        %v592 = vsel %vm591, %v589, %v590
        %v593 = vrot.slane %v583, 4
        %vm594 = vcmp.lt.s32.totalorder %v583, %v593
        %v595 = vsel %vm594, %v583, %v593
        %v596 = vrot.slane %v595, 2
        %vm597 = vcmp.lt.s32.totalorder %v595, %v596
        %v598 = vsel %vm597, %v595, %v596
        %v599 = vrot.slane %v598, 1
        %vm600 = vcmp.lt.s32.totalorder %v598, %v599
        %v601 = vsel %vm600, %v598, %v599
        %v602 = vlaneseq
        %v603 = vand.u32 %v602, 127
        %v604 = vadd.s32 %v603, 128
        %v605 = vcvt.s32.f32 %v592
        %v606 = vcvt.s32.f32 %v601
        %v608 = vperm.slane %v549, 0
        %v609 = vperm.slane %v549, 4
        %v613 = vperm.slane %v552, 1
        %v614 = vperm.slane %v552, 5
        %v618 = vperm.slane %v555, 0
        %v619 = vperm.slane %v555, 4
        %v623 = vperm.slane %v558, 1
        %v624 = vperm.slane %v558, 5
        %vm631 = vcmask 1046528
        %v632 = vrot.slane %v485, 1
        %v633 = vrot.slane %v487, 1
        %v634 = vsel %vm631, %v632, %v633
        %v635 = vrot.slane %v486, 1
        %v636 = vrot.slane %v488, 1
        %v637 = vsel %vm631, %v635, %v636
        %v642 = vrot.slane %v485, 3
        %v643 = vrot.slane %v486, 3
        %vm646 = vcmask 1040384
        %v647 = vsel %vm646, %v608, %v613
        %v648 = vsel %vm646, %v609, %v614
        %vm649 = vcmask 1041408
        %v650 = vsel %vm649, %v647, %v618
        %v651 = vsel %vm649, %v648, %v619
        %vm652 = vcmask 1042432
        %v653 = vsel %vm652, %v650, %v623
        %v654 = vsel %vm652, %v651, %v624
        %v655 = vsel %vm512, %v653, %v571
        %v656 = vsel %vm512, %v654, %v577
        %vm657 = vcmask 1044480
        %v658 = vsel %vm657, %v655, %v605
        %v659 = vsel %vm657, %v656, %v606
        %vm660 = vcmask 1045504
        %v661 = vsel %vm660, %v658, %v634
        %v662 = vsel %vm660, %v659, %v637
        %v663 = vsel %vm646, %v633, %v642
        %v664 = vsel %vm646, %v636, %v643
        %vm665 = vcmp.gt.f32.partialorder %v571, -4.59512
        %vm666 = vcmp.gt.f32.partialorder %v577, -4.59512
        %v667 = vsel %vm665, %v571, -inf
        %v668 = vsel %vm666, %v577, -inf
        %v669 = vmax.f32 %v667, %v668
        %670 = vmax.xlane.f32.xlu0 %v669
        %v671 = vpop.xlane.xlu0 %670
        // While loop
        $region37: #{forward.1} parent=35 // loop_pre_header
          _
        $region38: #{forward.1} parent=35 // loop_header
          %s673 = sphi 0, %s841
          %v674 = vphi %v667, %v828
          %v675 = vphi %v668, %v829
          %v676 = vphi 0.0, %v839
          %v677 = vphi 0.0, %v840
          %v678 = vphi %v671, %v834
          %p679 = scmp.lt.s32.totalorder %s673, 100
          %v681 = vrot.slane %v678, 2
          %s683 = vtos %v681
          %p684 = scmp.gt.f32.partialorder %s683, -4.59512
          %p685 = pnand %p679, %p684
          %p686 = pneg %p685
        $region39: #{forward.1} parent=35 // loop_header_branch
          %688 = sbr.rel (%p685) target = $region43
        $region40: #{forward.1} parent=35 // loop_body
          %vm689 = vcmp.eq.f32.partialorder %v674, %v678
          %vm690 = vcmp.eq.f32.partialorder %v675, %v678
          %v691 = vsel %vm689, %v603, 256
          %v692 = vsel %vm690, %v604, 256
          %vm693 = vcmask 1042434
          %v694 = vsel %vm693, %v691, 2147483647
          %v695 = vsel %vm693, %v692, 2147483647
          %vm696 = vcmp.lt.s32.totalorder %v694, %v695
          %v697 = vsel %vm696, %v694, %v695
          %v698 = vand.u32 %v697, 65535
          %v699 = vshra.s32 %v697, 16
          %v700 = vcvt.s32.f32 %v698
          %v701 = vcvt.s32.f32 %v699
          %702 = vmin.xlane.f32.xlu0 %v701
          %v703 = vpop.xlane.xlu0 %702
          %vm704 = vcmp.eq.f32.partialorder %v701, %v703
          %v705 = vsel %vm704, %v700, inf
          %706 = vmin.xlane.f32.xlu0 %v705
          %v707 = vpop.xlane.xlu0 %706
          %v708 = vcvt.f32.s32 %v707
          %v709 = vcvt.f32.s32 %v703
          %v710 = vshll.u32 %v709, 16
          %v711 = vadd.s32 %v710, %v708
          %vm712 = vcmp.eq.s32.totalorder %v603, %v711
          %vm713 = vcmp.eq.s32.totalorder %v604, %v711
          %v714 = vsel %vm712, 1, 0
          %v715 = vsel %vm713, 1, 0
          %v716 = vperm.slane %v714, 2
          %v717 = vperm.slane %v715, 2
          %vm718 = vcmp.eq.s32.totalorder %v716, 1
          %vm719 = vcmp.eq.s32.totalorder %v717, 1
          %v720 = vsel %vm718, %v661, 0.0
          %v721 = vsel %vm719, %v662, 0.0
          %v722 = vsel %vm718, %v663, 0.0
          %v723 = vsel %vm719, %v664, 0.0
          %v724 = vadd.f32 %v720, %v721
          %725 = vadd.xlane.f32.xlu0 %v724
          %v726 = vpop.xlane.xlu0 %725
          %v727 = vsel %vm512, %v722, 0.0
          %v728 = vsel %vm512, %v723, 0.0
          %v729 = vadd.f32 %v727, %v728
          %730 = vadd.xlane.f32.xlu0 %v729
          %v731 = vpop.xlane.xlu0 %730
          %v733 = vrot.slane %v726, 6
          %v735 = vsub.f32 %v726, %v733
          %v737 = vrot.slane %v735, 1
          %v739 = vmul.f32 %v735, %v737
          %v740 = vmin.f32 %v726, %v618
          %v741 = vmin.f32 %v726, %v619
          %v742 = vmax.f32 %v726, %v608
          %v743 = vmax.f32 %v726, %v609
          %v746 = vrot.slane %v742, 6
          %v747 = vrot.slane %v743, 6
          %v750 = vsub.f32 %v740, %v746
          %v751 = vsub.f32 %v741, %v747
          %v752 = vmax.f32 %v750, 0.0
          %v753 = vmax.f32 %v751, 0.0
          %v754 = vmin.f32 %v726, %v623
          %v755 = vmin.f32 %v726, %v624
          %v756 = vmax.f32 %v726, %v613
          %v757 = vmax.f32 %v726, %v614
          %v760 = vrot.slane %v756, 6
          %v761 = vrot.slane %v757, 6
          %v764 = vsub.f32 %v754, %v760
          %v765 = vsub.f32 %v755, %v761
          %v766 = vmax.f32 %v764, 0.0
          %v767 = vmax.f32 %v765, 0.0
          %v770 = vrot.slane %v766, 1
          %v771 = vrot.slane %v767, 1
          %v774 = vmul.f32 %v752, %v770
          %v775 = vmul.f32 %v753, %v771
          %777 = vset.pattern.permute.xlu0 0
          %778 = vperm.xlu0 %777, %v739
          %v779 = vpop.permute.xlu0 %778
          %v782 = vperm.slane %v565, 0
          %v783 = vperm.slane %v565, 4
          %v786 = vadd.f32 %v779, %v782
          %v787 = vadd.f32 %v779, %v783
          %v788 = vsub.f32 %v786, %v774
          %v789 = vsub.f32 %v787, %v775
          %v790 = vmax.f32 %v788, 1e-08
          %v791 = vmax.f32 %v789, 1e-08
          %v792 = vrcp.pop %v790
          %v793 = vmul.f32 %v790, %v792
          %v794 = vsub.f32 1.0, %v793
          %v795 = vmul.f32 %v792, %v794
          %v796 = vadd.f32 %v792, %v795
          %vm797 = vweird.f32 %v790
          %vm798 = vweird.f32 %v792
          %vm799 = vmor %vm797, %vm798
          %v800 = vsel %vm799, %v792, %v796
          %v801 = vand.u32 2147483647, %v790
          %vm802 = vcmp.eq.f32.partialorder %v801, 8.507059e+37
          %v803 = vand.u32 %v790, 2147483648
          %v804 = vor.u32 1.1754944e-38, %v803
          %v805 = vsel %vm802, %v804, %v800
          %v806 = vmul.f32 %v774, %v805
          %v807 = vrcp.pop %v791
          %v808 = vmul.f32 %v791, %v807
          %v809 = vsub.f32 1.0, %v808
          %v810 = vmul.f32 %v807, %v809
          %v811 = vadd.f32 %v807, %v810
          %vm812 = vweird.f32 %v791
          %vm813 = vweird.f32 %v807
          %vm814 = vmor %vm812, %vm813
          %v815 = vsel %vm814, %v807, %v811
          %v816 = vand.u32 2147483647, %v791
          %vm817 = vcmp.eq.f32.partialorder %v816, 8.507059e+37
          %v818 = vand.u32 %v791, 2147483648
          %v819 = vor.u32 1.1754944e-38, %v818
          %v820 = vsel %vm817, %v819, %v815
          %v821 = vmul.f32 %v775, %v820
          %vm822 = vcmp.le.f32.partialorder %v806, 0.01
          %vm823 = vcmp.le.f32.partialorder %v821, 0.01
          %vm824 = vmxor %vm712, 1
          %vm825 = vmxor %vm713, 1
          %vm826 = vmand %vm822, %vm824
          %vm827 = vmand %vm823, %vm825
          %v828 = vsel %vm826, %v674, -inf
          %v829 = vsel %vm827, %v675, -inf
          %v830 = vsel %vm693, %v828, -inf
          %v831 = vsel %vm693, %v829, -inf
          %v832 = vmax.f32 %v830, %v831
          %833 = vmax.xlane.f32.xlu0 %v832
          %v834 = vpop.xlane.xlu0 %833
          %v835 = vstv %s673
          %vm836 = vcmp.eq.s32.totalorder %v603, %v835
          %v837 = vsel %vm836, 1, 0
          %vm838 = vcmp.eq.s32.totalorder %v837, 1
          %v839 = vsel %vm838, %v726, %v676
          %v840 = vsel %vm838, %v731, %v677
          %s841 = sadd.s32 %s673, 1
        $region41: #{forward.1} parent=35 // loop_footer
          _
        $region42: #{forward.1} parent=35 // loop_footer_branch
          %672 = sbr.rel target = $region38
        $region43: #{forward.1} parent=35 // loop_exit
          _
        %v842 = vstv %s673
        %vm843 = vcmp.lt.s32.totalorder %v603, %v842
        %v844 = vsel %vm843, 1, 0
        %vm845 = vcmp.eq.s32.totalorder %v844, 1
        %v846 = vsel %vm845, %v676, -1.0
        %847 = vst [vmem:[%s334] sm:$0xf] %v846
        %v848 = vxor.u32 %v676, 2147483648
        %v849 = vmul.f32 %v848, 1.442695
        %v850 = vpow.pop %v849
        %v851 = vadd.f32 %v850, 1.0
        %v852 = vrcp.pop %v851
        %v853 = vmul.f32 %v851, %v852
        %v854 = vsub.f32 1.0, %v853
        %v855 = vmul.f32 %v852, %v854
        %v856 = vadd.f32 %v852, %v855
        %vm857 = vweird.f32 %v851
        %vm858 = vweird.f32 %v852
        %vm859 = vmor %vm857, %vm858
        %v860 = vsel %vm859, %v852, %v856
        %v861 = vand.u32 2147483647, %v851
        %vm862 = vcmp.eq.f32.partialorder %v861, 8.507059e+37
        %v863 = vand.u32 %v851, 2147483648
        %v864 = vor.u32 1.1754944e-38, %v863
        %v865 = vsel %vm862, %v864, %v860
        %v866 = vmul.f32 1.0, %v865
        %v867 = vsel %vm843, %v866, -1.0
        %868 = vst [vmem:[%s307 - $0x4] sm:$0x10] %v867
        %v869 = vcvt.f32.s32.to.zero.pseudo %v676
        %v870 = vsel %vm843, %v869, 4294967295
        %871 = vst [vmem:[%s313 - $0x5] sm:$0x20] %v870
        %v872 = vsel %vm845, %v677, -1.0
        %873 = vst [vmem:[%s338 - $0x6] sm:$0xc0] %v846
        %874 = vst [vmem:[%s338 + $0x2] sm:$0x1] %v872
        %875 = vst [vmem:[%s342 - $0x1] sm:$0xe] %v872
        %p876 = scmp.lt.s32.totalorder %s26, 1
        %s877 = scalar_select %p876, %s26, 1
        %s878 = smul.addr %s877, 4
        %s879 = scalar_lea.vmem %s4, %s878
        %s880 = sand.u32 %s149, 1
        %s881 = scalar_lea.sflag [#allocation3], %s880
        %s882 = sand.u32 %s149, 1
        %s883 = scalar_lea.vmem [#allocation2], %s882
        %s884 = sand.u32 %s175, 1
        %s885 = scalar_lea.sflag [#allocation5], %s884
        %s886 = sand.u32 %s175, 1
        %s887 = scalar_lea.vmem [#allocation4], %s886
        %p888 = scmp.lt.s32.totalorder %s26, 1
        %s889 = scalar_select %p888, %s26, 1
        %s890 = smul.addr %s889, 4
        %s891 = scalar_lea.vmem %s7, %s890
        %p892 = scmp.lt.s32.totalorder %s26, 1
        %s893 = scalar_select %p892, %s26, 1
        %s894 = smul.addr %s893, 4
        %s895 = scalar_lea.vmem %s8, %s894
        // Predicated region
        $region44: #{forward.1} parent=35 // pred_check
          %p896 = pneg %p133
        $region45: #{forward.1} parent=35 // pred_check_branch
          %898 = sbr.rel (%p896) target = $region47
        $region46: #{forward.1} parent=35 // pred_region
          _
        $region47: #{forward.1} parent=35 // pred_fallthru
          _
        // Predicated region
        $region48: #{forward.1} parent=35 // pred_check
          %p899 = pneg %p159
        $region49: #{forward.1} parent=35 // pred_check_branch
          %901 = sbr.rel (%p899) target = $region51
        $region50: #{forward.1} parent=35 // pred_region
          %903 = vsyncadd %s881, 0
          %s904 = scalar_lea.hbm %s5, %s26
          %s906 = sshll.u32 %s883, 4
          %s907 = int_to_ptr.vmem [resolvable:$true] %s906
          %s908 = sshll.u32 %s904, 4
          %s909 = int_to_ptr.hbm [resolvable:$true] %s908
          %911 = dma.vmem_to_hbm [thread:$0]  %s907, 16, %s909, %s881
        $region51: #{forward.1} parent=35 // pred_fallthru
          _
        // Predicated region
        $region52: #{forward.1} parent=35 // pred_check
          %p912 = pneg %p185
        $region53: #{forward.1} parent=35 // pred_check_branch
          %914 = sbr.rel (%p912) target = $region55
        $region54: #{forward.1} parent=35 // pred_region
          %916 = vsyncadd %s885, 0
          %s917 = scalar_lea.hbm %s6, %s26
          %s919 = sshll.u32 %s887, 4
          %s920 = int_to_ptr.vmem [resolvable:$true] %s919
          %s921 = sshll.u32 %s917, 4
          %s922 = int_to_ptr.hbm [resolvable:$true] %s921
          %924 = dma.vmem_to_hbm [thread:$0]  %s920, 16, %s922, %s885
        $region55: #{forward.1} parent=35 // pred_fallthru
          _
        // Predicated region
        $region56: #{forward.1} parent=35 // pred_check
          %p925 = pneg %p211
        $region57: #{forward.1} parent=35 // pred_check_branch
          %927 = sbr.rel (%p925) target = $region59
        $region58: #{forward.1} parent=35 // pred_region
          _
        $region59: #{forward.1} parent=35 // pred_fallthru
          _
        // Predicated region
        $region60: #{forward.1} parent=35 // pred_check
          %p928 = pneg %p237
        $region61: #{forward.1} parent=35 // pred_check_branch
          %930 = sbr.rel (%p928) target = $region63
        $region62: #{forward.1} parent=35 // pred_region
          _
        $region63: #{forward.1} parent=35 // pred_fallthru
          _
      $region36: #{forward.1} parent=5 // pred_fallthru
        _
      %p931 = scmp.le.s32.totalorder 2, %s21
      // Predicated region
      $region64: #{forward.1} parent=5 // pred_check
        %p932 = pneg %p931
      $region65: #{forward.1} parent=5 // pred_check_branch
        %934 = sbr.rel (%p932) target = $region67
      $region66: #{forward.1} parent=5 // pred_region
        %s935 = ssub.s32 %s21, 2
        // Predicated region
        $region68: #{forward.1} parent=66 // pred_check
          %p936 = pneg %p139
        $region69: #{forward.1} parent=66 // pred_check_branch
          %938 = sbr.rel (%p936) target = $region71
        $region70: #{forward.1} parent=66 // pred_region
          %p939 = scmp.lt.s32.totalorder %s27, 1
          %s940 = scalar_select %p939, %s27, 1
          %s941 = smul.addr %s940, 4
          %s942 = scalar_lea.vmem %s4, %s941
        $region71: #{forward.1} parent=66 // pred_fallthru
          _
        // Predicated region
        $region72: #{forward.1} parent=66 // pred_check
          %p943 = pneg %p165
        $region73: #{forward.1} parent=66 // pred_check_branch
          %945 = sbr.rel (%p943) target = $region75
        $region74: #{forward.1} parent=66 // pred_region
          %s946 = sand.u32 %s150, 1
          %s947 = scalar_lea.sflag [#allocation3], %s946
          %s948 = sand.u32 %s150, 1
          %s949 = scalar_lea.vmem [#allocation2], %s948
          %951 = dma.done %s947, 16
        $region75: #{forward.1} parent=66 // pred_fallthru
          _
        // Predicated region
        $region76: #{forward.1} parent=66 // pred_check
          %p952 = pneg %p191
        $region77: #{forward.1} parent=66 // pred_check_branch
          %954 = sbr.rel (%p952) target = $region79
        $region78: #{forward.1} parent=66 // pred_region
          %s955 = sand.u32 %s176, 1
          %s956 = scalar_lea.sflag [#allocation5], %s955
          %s957 = sand.u32 %s176, 1
          %s958 = scalar_lea.vmem [#allocation4], %s957
          %960 = dma.done %s956, 16
        $region79: #{forward.1} parent=66 // pred_fallthru
          _
        // Predicated region
        $region80: #{forward.1} parent=66 // pred_check
          %p961 = pneg %p217
        $region81: #{forward.1} parent=66 // pred_check_branch
          %963 = sbr.rel (%p961) target = $region83
        $region82: #{forward.1} parent=66 // pred_region
          %p964 = scmp.lt.s32.totalorder %s27, 1
          %s965 = scalar_select %p964, %s27, 1
          %s966 = smul.addr %s965, 4
          %s967 = scalar_lea.vmem %s7, %s966
        $region83: #{forward.1} parent=66 // pred_fallthru
          _
        // Predicated region
        $region84: #{forward.1} parent=66 // pred_check
          %p968 = pneg %p243
        $region85: #{forward.1} parent=66 // pred_check_branch
          %970 = sbr.rel (%p968) target = $region87
        $region86: #{forward.1} parent=66 // pred_region
          %p971 = scmp.lt.s32.totalorder %s27, 1
          %s972 = scalar_select %p971, %s27, 1
          %s973 = smul.addr %s972, 4
          %s974 = scalar_lea.vmem %s8, %s973
        $region87: #{forward.1} parent=66 // pred_fallthru
          _
      $region67: #{forward.1} parent=5 // pred_fallthru
        _
    $region6: #{forward.1} parent=1 // loop_footer
      %s25 = sadd.s32 1, %s21
    $region7: #{forward.1} parent=1 // loop_footer_branch
      %20 = sbr.rel target = $region3
    $region8: #{forward.1} parent=1 // loop_exit
      _
    %975 = vsyncpa [#allocation3], 1
    %s976 = scalar_lea.sflag [#allocation3], 1
    %977 = vsyncpa %s976, 1
    %978 = vsyncpa [#allocation5], 1
    %s979 = scalar_lea.sflag [#allocation5], 1
    %980 = vsyncpa %s979, 1

</llo_original>
